<compile_context>
chip_gen: v6e
topology: v6e:2x2x1
jax: 0.10.0
libtpu: 0.0.40
codegen_flags: <defaults>
</compile_context>

<pallas_src>
import jax
import jax.numpy as jnp
from jax.experimental import pallas as pl
from jax.experimental.pallas import tpu as pltpu

VOCAB = 64          # nn.Embedding(64, 64)
EMB = 64
C1, C2, C3 = 32, 16, 16
N_CONV = 3          # three kernel-size-2 Conv1d layers
NUM_CLASSES = 4
NC_PAD = 128        # lane-dense padded class dim (sliced back to 4 in wrapper)
BATCH = 2
SEQ = 16            # flattened codebook length; must be > N_CONV
T_VALID = SEQ - N_CONV   # valid time steps after three k=2 convs


# ---------------------------------------------------------------------------
# Pallas kernel
# ---------------------------------------------------------------------------
def vqvae_head_kernel(tok_ref, w1_ref, w2_ref, w3_ref, wh_ref, bias_ref,
                      sel_ref, out_ref):
    R = tok_ref.shape[0]                       # rows in this block = block_b * L

    # ---- layer 1: embedding lookup fused with conv1 as one K=128 matmul.
    # Row r carries [tok[r], tok[r+1]] (shift done on the host), so the fused
    # layer-1 input is the 128-wide [onehot(tok) | onehot(tok_next)], built
    # directly in bf16 (exact 0/1 values -> native MXU throughput).
    tok = tok_ref[:, 0:1]                      # (R, 1) i32
    tok_nxt = tok_ref[:, 1:2]                  # (R, 1) i32 == tok[r+1]
    lane = jax.lax.broadcasted_iota(jnp.int32, (R, 2 * VOCAB), 1)
    x1 = ((lane == tok) | (lane == tok_nxt + VOCAB)).astype(jnp.bfloat16)

    r1 = jnp.maximum(
        jnp.dot(x1, w1_ref[...], preferred_element_type=jnp.float32)
        + bias_ref[0:1, 0:C1], 0.0)            # (R, 32) f32

    # ---- layers 2/3: both k=2 taps in ONE matmul (taps stacked along the
    # output dim on the host); the second half is brought to row t via a
    # sublane roll (XLU slot, MXU stays free).  Rows whose receptive field
    # crosses a sequence end (or where the roll wraps) compute garbage that is
    # discarded by the `sel` mask below (it keeps only t % L < L - N_CONV).
    def conv_k2_relu(x_f32, w_ref, cout, cb):
        z = jnp.dot(x_f32.astype(jnp.bfloat16), w_ref[...],
                    preferred_element_type=jnp.float32)           # (R, 2*cout)
        tap1 = pltpu.roll(z[:, cout:2 * cout], shift=R - 1, axis=0)  # == z[t+1]
        return jnp.maximum(z[:, 0:cout] + tap1 + cb, 0.0)

    r2 = conv_k2_relu(r1, w2_ref, C2, bias_ref[1:2, 0:C2])        # (R, 16)
    r3 = conv_k2_relu(r2, w3_ref, C3, bias_ref[2:3, 0:C3])        # (R, 16)

    # ---- per-sequence masked mean over the L - N_CONV valid steps as a bf16
    # selection matmul (sel precomputed on the host, grid-invariant).  BN3 and
    # 1/T_VALID are folded into wh / bias[3]; the tiny head matmul stays f32.
    feat = jnp.dot(sel_ref[...], r3.astype(jnp.bfloat16),
                   preferred_element_type=jnp.float32)            # (Bblk, 16)
    logits = (jnp.dot(feat, wh_ref[...], preferred_element_type=jnp.float32)
              + bias_ref[3:4, :])
    # mlp_head = Linear -> ReLU in the PyTorch spec, so ReLU the logits.
    out_ref[...] = jnp.maximum(logits, 0.0)                       # (Bblk, 128)


# ---------------------------------------------------------------------------
# Host-side parameter construction + constant folding
# ---------------------------------------------------------------------------
def make_torch_params(key):
    """PyTorch-layout parameters (Conv1d: (Cout, Cin, K); Linear: (out, in))."""
    ks = jax.random.split(key, 6)

    def conv(k, cin, cout):
        kw, kb = jax.random.split(k)
        return {"w": jax.random.normal(kw, (cout, cin, 2), jnp.float32) * 0.25,
                "b": jax.random.normal(kb, (cout,), jnp.float32) * 0.1}

    def bn(cout):
        return {"gamma": jnp.linspace(0.6, 1.4, cout, dtype=jnp.float32),
                "beta": jnp.linspace(-0.2, 0.2, cout, dtype=jnp.float32),
                "mean": jnp.linspace(-0.1, 0.1, cout, dtype=jnp.float32),
                "var": jnp.linspace(0.8, 1.2, cout, dtype=jnp.float32)}

    return {
        "emb": jax.random.normal(ks[0], (VOCAB, EMB), jnp.float32) * 0.25,
        "conv1": conv(ks[1], EMB, C1), "bn1": bn(C1),
        "conv2": conv(ks[2], C1, C2), "bn2": bn(C2),
        "conv3": conv(ks[3], C2, C3), "bn3": bn(C3),
        "head_w": jax.random.normal(ks[4], (NUM_CLASSES, C3), jnp.float32) * 0.25,
        "head_b": jnp.linspace(-0.1, 0.1, NUM_CLASSES, dtype=jnp.float32),
    }


def _bn_scale_shift(bn, eps=1e-5):
    s = bn["gamma"] / jnp.sqrt(bn["var"] + eps)
    return s, bn["beta"] - bn["mean"] * s


def fold_params(p):
    """Fold embedding, BatchNorms and the temporal mean into 6 kernel operands."""
    s1, b1 = _bn_scale_shift(p["bn1"])
    s2, b2 = _bn_scale_shift(p["bn2"])
    s3, b3 = _bn_scale_shift(p["bn3"])

    # conv taps as (Cin, Cout) matrices (channels-last matmul layout)
    w1a, w1b = p["conv1"]["w"][:, :, 0].T, p["conv1"]["w"][:, :, 1].T
    w2a, w2b = p["conv2"]["w"][:, :, 0].T, p["conv2"]["w"][:, :, 1].T
    w3a, w3b = p["conv3"]["w"][:, :, 0].T, p["conv3"]["w"][:, :, 1].T

    # layer 1: fold the embedding table into the taps (lookup+conv == onehot@(E@W))
    # and stack the taps along the CONTRACTION dim -> one K=128 matmul.
    w1 = jnp.concatenate([p["emb"] @ w1a, p["emb"] @ w1b], axis=0)        # (128, 32)
    cb1 = p["conv1"]["b"]

    # layers 2/3: fold the previous BN's scale into the taps and its shift into
    # the bias; taps stacked along the OUTPUT dim (kernel splits + shift-adds).
    w2 = jnp.concatenate([s1[:, None] * w2a, s1[:, None] * w2b], axis=1)  # (32, 32)
    cb2 = p["conv2"]["b"] + b1 @ w2a + b1 @ w2b

    w3 = jnp.concatenate([s2[:, None] * w3a, s2[:, None] * w3b], axis=1)  # (16, 32)
    cb3 = p["conv3"]["b"] + b2 @ w3a + b2 @ w3b

    # head: fold BN3 scale and 1/T_VALID (the mean) into W, BN3 shift into b
    wh = p["head_w"].T                                   # (16, 4)
    wh_f = (s3[:, None] * wh) / float(T_VALID)
    bh_f = b3 @ wh + p["head_b"]

    wh_pad = jnp.zeros((C3, NC_PAD), jnp.float32).at[:, :NUM_CLASSES].set(wh_f)
    bias = (jnp.zeros((4, 128), jnp.float32)
            .at[0, :C1].set(cb1)
            .at[1, :C2].set(cb2)
            .at[2, :C3].set(cb3)
            .at[3, :NUM_CLASSES].set(bh_f))
    return (w1.astype(jnp.bfloat16), w2.astype(jnp.bfloat16),
            w3.astype(jnp.bfloat16), wh_pad, bias)


# ---------------------------------------------------------------------------
# pallas_call wrapper
# ---------------------------------------------------------------------------
def _default_block_b(B):
    # Prefer >=2 grid blocks (so v7x's 2 TensorCores both get work from the
    # "parallel" axis) with block_b a multiple of 8 (sublane rule for the
    # blocked (block_b, 128) output) and R = block_b*SEQ >= 256 rows to feed
    # the MXU.  Capped at 256 sequences (R = 4096) so the precomputed
    # (block_b, R) sel mask + activations stay a few MiB — comfortable inside
    # v7x's 32 MiB scoped VMEM and small enough to pipeline on v5e.
    for cand in (256, 128, 64, 32, 16, 8):
        if B % cand == 0 and B // cand >= 2:
            return cand
    return B


def vqvae_conv_forward(tokens, folded_params, *, block_b=None):
    """tokens: (B, L) int32 codebook indices in [0, 64).  Returns (logits, codebook_x)."""
    B, L = tokens.shape
    assert L == SEQ and L > N_CONV       # 1/T_VALID is folded into the head weights
    if block_b is None:
        block_b = _default_block_b(B)
    # (8,128) sublane rule for the blocked output / token tiles.
    assert B % block_b == 0 and (block_b == B or block_b % 8 == 0), block_b

    w1, w2, w3, wh_pad, bias = folded_params
    R = block_b * L

    # Row r = b*L + t carries [tok[b,t], tok[b,t+1]]: the k=2 shifted tap for
    # layer 1 is precomputed here, so the kernel needs no shift for layer 1.
    # The per-sequence wraparound row only feeds time steps discarded by sel.
    tok_pair = jnp.stack([tokens, jnp.roll(tokens, -1, axis=1)], axis=-1)
    tok_pair = tok_pair.reshape(B * L, 2).astype(jnp.int32)

    # Grid-invariant masked-mean selector: sel[b, b*L + t] = 1 iff t is one of
    # the L - N_CONV time steps that survive the three k=2 convs (this is also
    # what discards the roll/wraparound garbage rows).  Built once, bf16 (0/1).
    row = jnp.arange(block_b, dtype=jnp.int32)[:, None]
    pos = jnp.arange(R, dtype=jnp.int32)[None, :]
    sel = ((pos // L == row) & (pos % L < L - N_CONV)).astype(jnp.bfloat16)

    logits_pad = pl.pallas_call(
        vqvae_head_kernel,
        grid_spec=pltpu.PrefetchScalarGridSpec(
            num_scalar_prefetch=0,
            grid=(B // block_b,),
            in_specs=[
                pl.BlockSpec((R, 2), lambda i: (i, 0)),      # tokens, batch-blocked
                pl.BlockSpec(w1.shape, lambda i: (0, 0)),    # weights stay resident
                pl.BlockSpec(w2.shape, lambda i: (0, 0)),
                pl.BlockSpec(w3.shape, lambda i: (0, 0)),
                pl.BlockSpec(wh_pad.shape, lambda i: (0, 0)),
                pl.BlockSpec(bias.shape, lambda i: (0, 0)),
                pl.BlockSpec(sel.shape, lambda i: (0, 0)),   # grid-invariant selector
            ],
            out_specs=pl.BlockSpec((block_b, NC_PAD), lambda i: (i, 0)),
        ),
        out_shape=jax.ShapeDtypeStruct((B, NC_PAD), jnp.float32),
        compiler_params=pltpu.CompilerParams(
            dimension_semantics=("parallel",),   # v7x: shard batch blocks over 2 TCs
            vmem_limit_bytes=32 * 1024 * 1024,   # within v7x's 64 MiB physical VMEM
        ),
    )(tok_pair, w1, w2, w3, wh_pad, bias, sel)

    # Lane-dense (B, 128) store in the kernel; slice the real 4 classes here.
    # forward() also returns x_recon; TODO(synk): not reproducible (VQVAE in ckpt).
    return logits_pad[:, :NUM_CLASSES], tokens


# ---------------------------------------------------------------------------
# Pure-JAX reference mirroring the PyTorch math (unfolded, all f32)
# ---------------------------------------------------------------------------
def reference_forward(tokens, p):
    x = p["emb"][tokens]                                   # (B, L, 64)

    def layer(x, conv, bn):
        wa, wb = conv["w"][:, :, 0].T, conv["w"][:, :, 1].T
        y = (jnp.einsum("btc,cd->btd", x[:, :-1, :], wa)
             + jnp.einsum("btc,cd->btd", x[:, 1:, :], wb) + conv["b"])
        y = jnp.maximum(y, 0.0)                            # Conv -> ReLU -> BN (eval)
        s = bn["gamma"] / jnp.sqrt(bn["var"] + 1e-5)
        return s * y + (bn["beta"] - bn["mean"] * s)

    x = layer(x, p["conv1"], p["bn1"])
    x = layer(x, p["conv2"], p["bn2"])
    x = layer(x, p["conv3"], p["bn3"])
    feat = x.mean(axis=1)
    logits = feat @ p["head_w"].T + p["head_b"]
    return jnp.maximum(logits, 0.0)


if __name__ == "__main__":
    key = jax.random.PRNGKey(0)
    k_tok, k_par = jax.random.split(key)
    tokens = jax.random.randint(k_tok, (BATCH, SEQ), 0, VOCAB, dtype=jnp.int32)
    torch_params = make_torch_params(k_par)
    folded = fold_params(torch_params)

    logits, codebook_x = vqvae_conv_forward(tokens, folded)
    logits = jax.block_until_ready(logits)

    ref = reference_forward(tokens, torch_params)
    assert logits.shape == (BATCH, NUM_CLASSES)
    # Kernel uses bf16 MXU operands (folded weights, onehot, sel, activations);
    # reference is unfolded all-f32, so compare at a bf16-appropriate tolerance.
    assert jnp.allclose(logits, ref, atol=3e-2, rtol=3e-2), (logits, ref)
    print("KERNEL_OK")
</pallas_src>

<mosaic_0001>
module attributes {stable_mosaic.version = 11 : i64} {
  func.func @vqvae_head_kernel(%arg0: i32, %arg1: memref<32x2xi32, #tpu.memory_space<vmem>>, %arg2: memref<128x32xbf16, #tpu.memory_space<vmem>>, %arg3: memref<32x32xbf16, #tpu.memory_space<vmem>>, %arg4: memref<16x32xbf16, #tpu.memory_space<vmem>>, %arg5: memref<16x128xf32, #tpu.memory_space<vmem>>, %arg6: memref<4x128xf32, #tpu.memory_space<vmem>>, %arg7: memref<2x32xbf16, #tpu.memory_space<vmem>>, %arg8: memref<2x128xf32, #tpu.memory_space<vmem>>) attributes {dimension_semantics = [#tpu.dimension_semantics<parallel>], iteration_bounds = array<i64: 1>, scalar_prefetch = 0 : i64, scratch_operands = 0 : i64, tpu.core_type = #tpu.core_type<tc>, window_params = [{transform_indices = @transform_0, window_bounds = array<i64: 32, 2>}, {pipeline_mode = #tpu.pipeline_mode<synchronous>, transform_indices = @transform_1, window_bounds = array<i64: 128, 32>}, {pipeline_mode = #tpu.pipeline_mode<synchronous>, transform_indices = @transform_2, window_bounds = array<i64: 32, 32>}, {pipeline_mode = #tpu.pipeline_mode<synchronous>, transform_indices = @transform_3, window_bounds = array<i64: 16, 32>}, {pipeline_mode = #tpu.pipeline_mode<synchronous>, transform_indices = @transform_4, window_bounds = array<i64: 16, 128>}, {pipeline_mode = #tpu.pipeline_mode<synchronous>, transform_indices = @transform_5, window_bounds = array<i64: 4, 128>}, {pipeline_mode = #tpu.pipeline_mode<synchronous>, transform_indices = @transform_6, window_bounds = array<i64: 2, 32>}, {transform_indices = @transform_7, window_bounds = array<i64: 2, 128>}]} {
    %c0 = arith.constant 0 : index
    %c0_0 = arith.constant 0 : index
    %0 = vector.load %arg1[%c0, %c0_0] : memref<32x2xi32, #tpu.memory_space<vmem>>, vector<32x1xi32>
    %c0_1 = arith.constant 0 : index
    %c1 = arith.constant 1 : index
    %1 = vector.load %arg1[%c0_1, %c1] : memref<32x2xi32, #tpu.memory_space<vmem>>, vector<32x1xi32>
    %2 = tpu.iota {dimensions = array<i32: 1>} : vector<32x128xi32>
    %3 = vector.broadcast %0 : vector<32x1xi32> to vector<32x128xi32>
    %4 = arith.cmpi eq, %2, %3 : vector<32x128xi32>
    %c64_i32 = arith.constant 64 : i32
    %5 = vector.broadcast %c64_i32 : i32 to vector<32x1xi32>
    %6 = arith.addi %1, %5 : vector<32x1xi32>
    %7 = vector.broadcast %6 : vector<32x1xi32> to vector<32x128xi32>
    %8 = arith.cmpi eq, %2, %7 : vector<32x128xi32>
    %9 = arith.ori %4, %8 : vector<32x128xi1>
    %10 = arith.extui %9 : vector<32x128xi1> to vector<32x128xi32>
    %11 = arith.sitofp %10 : vector<32x128xi32> to vector<32x128xf32>
    %12 = arith.truncf %11 : vector<32x128xf32> to vector<32x128xbf16>
    %c0_2 = arith.constant 0 : index
    %c0_3 = arith.constant 0 : index
    %13 = vector.load %arg2[%c0_2, %c0_3] : memref<128x32xbf16, #tpu.memory_space<vmem>>, vector<128x32xbf16>
    %cst = arith.constant dense<0.000000e+00> : vector<32x32xf32>
    %14 = tpu.matmul %12, %13, %cst {dimension_numbers = #tpu.dot_dimension_numbers<[1], [0], [0], [1], [0, 0, 1, 1], [], []>} : vector<32x128xbf16>, vector<128x32xbf16>, vector<32x32xf32> -> vector<32x32xf32>
    %c0_4 = arith.constant 0 : index
    %c0_5 = arith.constant 0 : index
    %15 = vector.load %arg6[%c0_4, %c0_5] : memref<4x128xf32, #tpu.memory_space<vmem>>, vector<1x32xf32>
    %16 = vector.broadcast %15 : vector<1x32xf32> to vector<32x32xf32>
    %17 = arith.addf %14, %16 : vector<32x32xf32>
    %cst_6 = arith.constant 0.000000e+00 : f32
    %18 = vector.broadcast %cst_6 : f32 to vector<32x32xf32>
    %19 = arith.maximumf %17, %18 : vector<32x32xf32>
    %c1_7 = arith.constant 1 : index
    %c0_8 = arith.constant 0 : index
    %20 = vector.load %arg6[%c1_7, %c0_8] : memref<4x128xf32, #tpu.memory_space<vmem>>, vector<1x16xf32>
    %21 = arith.truncf %19 : vector<32x32xf32> to vector<32x32xbf16>
    %c0_9 = arith.constant 0 : index
    %c0_10 = arith.constant 0 : index
    %22 = vector.load %arg3[%c0_9, %c0_10] : memref<32x32xbf16, #tpu.memory_space<vmem>>, vector<32x32xbf16>
    %cst_11 = arith.constant dense<0.000000e+00> : vector<32x32xf32>
    %23 = tpu.matmul %21, %22, %cst_11 {dimension_numbers = #tpu.dot_dimension_numbers<[1], [0], [0], [1], [0, 0, 1, 1], [], []>} : vector<32x32xbf16>, vector<32x32xbf16>, vector<32x32xf32> -> vector<32x32xf32>
    %24 = vector.extract_strided_slice %23 {offsets = [0, 16], sizes = [32, 16], strides = [1, 1]} : vector<32x32xf32> to vector<32x16xf32>
    %c31_i32 = arith.constant 31 : i32
    %25 = tpu.dynamic_rotate %24 by %c31_i32 dim 0 : vector<32x16xf32>, i32 -> vector<32x16xf32>
    %26 = vector.extract_strided_slice %23 {offsets = [0, 0], sizes = [32, 16], strides = [1, 1]} : vector<32x32xf32> to vector<32x16xf32>
    %27 = arith.addf %26, %25 : vector<32x16xf32>
    %28 = vector.broadcast %20 : vector<1x16xf32> to vector<32x16xf32>
    %29 = arith.addf %27, %28 : vector<32x16xf32>
    %cst_12 = arith.constant 0.000000e+00 : f32
    %30 = vector.broadcast %cst_12 : f32 to vector<32x16xf32>
    %31 = arith.maximumf %29, %30 : vector<32x16xf32>
    %c2 = arith.constant 2 : index
    %c0_13 = arith.constant 0 : index
    %32 = vector.load %arg6[%c2, %c0_13] : memref<4x128xf32, #tpu.memory_space<vmem>>, vector<1x16xf32>
    %33 = arith.truncf %31 : vector<32x16xf32> to vector<32x16xbf16>
    %c0_14 = arith.constant 0 : index
    %c0_15 = arith.constant 0 : index
    %34 = vector.load %arg4[%c0_14, %c0_15] : memref<16x32xbf16, #tpu.memory_space<vmem>>, vector<16x32xbf16>
    %cst_16 = arith.constant dense<0.000000e+00> : vector<32x32xf32>
    %35 = tpu.matmul %33, %34, %cst_16 {dimension_numbers = #tpu.dot_dimension_numbers<[1], [0], [0], [1], [0, 0, 1, 1], [], []>} : vector<32x16xbf16>, vector<16x32xbf16>, vector<32x32xf32> -> vector<32x32xf32>
    %36 = vector.extract_strided_slice %35 {offsets = [0, 16], sizes = [32, 16], strides = [1, 1]} : vector<32x32xf32> to vector<32x16xf32>
    %c31_i32_17 = arith.constant 31 : i32
    %37 = tpu.dynamic_rotate %36 by %c31_i32_17 dim 0 : vector<32x16xf32>, i32 -> vector<32x16xf32>
    %38 = vector.extract_strided_slice %35 {offsets = [0, 0], sizes = [32, 16], strides = [1, 1]} : vector<32x32xf32> to vector<32x16xf32>
    %39 = arith.addf %38, %37 : vector<32x16xf32>
    %40 = vector.broadcast %32 : vector<1x16xf32> to vector<32x16xf32>
    %41 = arith.addf %39, %40 : vector<32x16xf32>
    %cst_18 = arith.constant 0.000000e+00 : f32
    %42 = vector.broadcast %cst_18 : f32 to vector<32x16xf32>
    %43 = arith.maximumf %41, %42 : vector<32x16xf32>
    %c0_19 = arith.constant 0 : index
    %c0_20 = arith.constant 0 : index
    %44 = vector.load %arg7[%c0_19, %c0_20] : memref<2x32xbf16, #tpu.memory_space<vmem>>, vector<2x32xbf16>
    %45 = arith.truncf %43 : vector<32x16xf32> to vector<32x16xbf16>
    %cst_21 = arith.constant dense<0.000000e+00> : vector<2x16xf32>
    %46 = tpu.matmul %44, %45, %cst_21 {dimension_numbers = #tpu.dot_dimension_numbers<[1], [0], [0], [1], [0, 0, 1, 1], [], []>} : vector<2x32xbf16>, vector<32x16xbf16>, vector<2x16xf32> -> vector<2x16xf32>
    %c0_22 = arith.constant 0 : index
    %c0_23 = arith.constant 0 : index
    %47 = vector.load %arg5[%c0_22, %c0_23] : memref<16x128xf32, #tpu.memory_space<vmem>>, vector<16x128xf32>
    %cst_24 = arith.constant dense<0.000000e+00> : vector<2x128xf32>
    %48 = tpu.matmul %46, %47, %cst_24 {dimension_numbers = #tpu.dot_dimension_numbers<[1], [0], [0], [1], [0, 0, 1, 1], [], []>} : vector<2x16xf32>, vector<16x128xf32>, vector<2x128xf32> -> vector<2x128xf32>
    %c3 = arith.constant 3 : index
    %c0_25 = arith.constant 0 : index
    %49 = vector.load %arg6[%c3, %c0_25] : memref<4x128xf32, #tpu.memory_space<vmem>>, vector<1x128xf32>
    %50 = vector.broadcast %49 : vector<1x128xf32> to vector<2x128xf32>
    %51 = arith.addf %48, %50 : vector<2x128xf32>
    %cst_26 = arith.constant 0.000000e+00 : f32
    %52 = vector.broadcast %cst_26 : f32 to vector<2x128xf32>
    %53 = arith.maximumf %51, %52 : vector<2x128xf32>
    %c0_27 = arith.constant 0 : index
    %c0_28 = arith.constant 0 : index
    %54 = vector.load %arg8[%c0_27, %c0_28] : memref<2x128xf32, #tpu.memory_space<vmem>>, vector<2x128xf32>
    tpu.vector_store %arg8[%c0_27, %c0_28], %53 {strides = array<i32>} : memref<2x128xf32, #tpu.memory_space<vmem>>, vector<2x128xf32>,
    return
  }
  func.func @transform_0(%arg0: i32) -> (i32, i32) {
    %c0_i32 = arith.constant 0 : i32
    %c0_i32_0 = arith.constant 0 : i32
    return %arg0, %c0_i32 : i32, i32
  }
  func.func @transform_1(%arg0: i32) -> (i32, i32) {
    %c0_i32 = arith.constant 0 : i32
    %c0_i32_0 = arith.constant 0 : i32
    %c0_i32_1 = arith.constant 0 : i32
    return %c0_i32, %c0_i32_0 : i32, i32
  }
  func.func @transform_2(%arg0: i32) -> (i32, i32) {
    %c0_i32 = arith.constant 0 : i32
    %c0_i32_0 = arith.constant 0 : i32
    %c0_i32_1 = arith.constant 0 : i32
    return %c0_i32, %c0_i32_0 : i32, i32
  }
  func.func @transform_3(%arg0: i32) -> (i32, i32) {
    %c0_i32 = arith.constant 0 : i32
    %c0_i32_0 = arith.constant 0 : i32
    %c0_i32_1 = arith.constant 0 : i32
    return %c0_i32, %c0_i32_0 : i32, i32
  }
  func.func @transform_4(%arg0: i32) -> (i32, i32) {
    %c0_i32 = arith.constant 0 : i32
    %c0_i32_0 = arith.constant 0 : i32
    %c0_i32_1 = arith.constant 0 : i32
    return %c0_i32, %c0_i32_0 : i32, i32
  }
  func.func @transform_5(%arg0: i32) -> (i32, i32) {
    %c0_i32 = arith.constant 0 : i32
    %c0_i32_0 = arith.constant 0 : i32
    %c0_i32_1 = arith.constant 0 : i32
    return %c0_i32, %c0_i32_0 : i32, i32
  }
  func.func @transform_6(%arg0: i32) -> (i32, i32) {
    %c0_i32 = arith.constant 0 : i32
    %c0_i32_0 = arith.constant 0 : i32
    %c0_i32_1 = arith.constant 0 : i32
    return %c0_i32, %c0_i32_0 : i32, i32
  }
  func.func @transform_7(%arg0: i32) -> (i32, i32) {
    %c0_i32 = arith.constant 0 : i32
    %c0_i32_0 = arith.constant 0 : i32
    return %arg0, %c0_i32 : i32, i32
  }
}

</mosaic_0001>

<llo_original>
// kernel: tpu_custom_call.1
$region0: #{tpu_custom_call.1}
  #allocation0 [shape = 'u32[]', space=smem, size = 0x4, offset = 0x4, fixed_abs, tag = 'smem constant byte address 0x4 - core index']
  #allocation1 [shape = 'u32[144,128]{1,0:T(1,128)}', space=vmem, size = 0x12000, scoped, tag = 'internal scratch']
  %s0 = inlined_call_operand.vmem [shape: s32[32,2], index: 0, kind: input, shape index: {}]
  %s1 = inlined_call_operand.vmem [shape: bf16[128,32], index: 1, kind: input, shape index: {}]
  %s2 = inlined_call_operand.vmem [shape: bf16[32,32], index: 2, kind: input, shape index: {}]
  %s3 = inlined_call_operand.vmem [shape: bf16[16,32], index: 3, kind: input, shape index: {}]
  %s4 = inlined_call_operand.vmem [shape: f32[16,128], index: 4, kind: input, shape index: {}]
  %s5 = inlined_call_operand.vmem [shape: f32[4,128], index: 5, kind: input, shape index: {}]
  %s6 = inlined_call_operand.vmem [shape: bf16[2,32], index: 6, kind: input, shape index: {}]
  %s7 = inlined_call_operand.hbm [shape: f32[2,128], index: 7, kind: output, shape index: {}]
  %s8 = sld [smem:[#allocation0]]
  $region38: #{tpu_custom_call.1} parent=0
    _
  %s10 = ssub.s32 1, %s8
  %s11 = scalar_select 0, %s10, %s8
  $region1: #{tpu_custom_call.1} parent=0
    #allocation2 [shape = 'u8[1024]{0}', space=vmem, size = 0x400, scoped, tag = 'output window, operand 0, single buffered']
    #allocation3 [shape = 's32[1]{0}', space=sflag, size = 0x4, scoped, tag = 'scoped memory for tpu_custom_call.1']
    %12 = vsyncpa [#allocation3], 0
    // Predicated region
    $region2: #{tpu_custom_call.1} parent=1 // pred_check
      _
    $region3: #{tpu_custom_call.1} parent=1 // pred_check_branch
      %14 = sbr.rel (0) target = $region5
    $region4: #{tpu_custom_call.1} parent=1 // pred_region
      _
    $region5: #{tpu_custom_call.1} parent=1 // pred_fallthru
      _
    // Predicated region
    $region6: #{tpu_custom_call.1} parent=1 // pred_check
      _
    $region7: #{tpu_custom_call.1} parent=1 // pred_check_branch
      %16 = sbr.rel (0) target = $region9
    $region8: #{tpu_custom_call.1} parent=1 // pred_region
      _
    $region9: #{tpu_custom_call.1} parent=1 // pred_fallthru
      _
    // Predicated region
    $region10: #{tpu_custom_call.1} parent=1 // pred_check
      _
    $region11: #{tpu_custom_call.1} parent=1 // pred_check_branch
      %18 = sbr.rel (0) target = $region13
    $region12: #{tpu_custom_call.1} parent=1 // pred_region
      _
    $region13: #{tpu_custom_call.1} parent=1 // pred_fallthru
      _
    // Predicated region
    $region14: #{tpu_custom_call.1} parent=1 // pred_check
      _
    $region15: #{tpu_custom_call.1} parent=1 // pred_check_branch
      %20 = sbr.rel (0) target = $region17
    $region16: #{tpu_custom_call.1} parent=1 // pred_region
      _
    $region17: #{tpu_custom_call.1} parent=1 // pred_fallthru
      _
    // Predicated region
    $region18: #{tpu_custom_call.1} parent=1 // pred_check
      _
    $region19: #{tpu_custom_call.1} parent=1 // pred_check_branch
      %22 = sbr.rel (0) target = $region21
    $region20: #{tpu_custom_call.1} parent=1 // pred_region
      _
    $region21: #{tpu_custom_call.1} parent=1 // pred_fallthru
      _
    // Predicated region
    $region22: #{tpu_custom_call.1} parent=1 // pred_check
      _
    $region23: #{tpu_custom_call.1} parent=1 // pred_check_branch
      %24 = sbr.rel (0) target = $region25
    $region24: #{tpu_custom_call.1} parent=1 // pred_region
      _
    $region25: #{tpu_custom_call.1} parent=1 // pred_fallthru
      _
    // Predicated region
    $region26: #{tpu_custom_call.1} parent=1 // pred_check
      _
    $region27: #{tpu_custom_call.1} parent=1 // pred_check_branch
      %26 = sbr.rel (0) target = $region29
    $region28: #{tpu_custom_call.1} parent=1 // pred_region
      _
    $region29: #{tpu_custom_call.1} parent=1 // pred_fallthru
      _
    %v28 = vld [vmem:[%s0] sm:$0xff]
    %v29 = vld [vmem:[%s0 + $0x8] sm:$0xff]
    %v30 = vld [vmem:[%s0 + $0x10] sm:$0xff]
    %v31 = vld [vmem:[%s0 + $0x18] sm:$0xff]
    %v32 = vlaneseq
    %v33 = vand.u32 %v32, 127
    %34 = vset.pattern.permute.xlu0 0
    %35 = vperm.xlu0 %34, %v28
    %v36 = vpop.permute.xlu0 %35
    %37 = vset.pattern.permute.xlu0 0
    %38 = vperm.xlu0 %37, %v29
    %v39 = vpop.permute.xlu0 %38
    %40 = vset.pattern.permute.xlu0 0
    %41 = vperm.xlu0 %40, %v30
    %v42 = vpop.permute.xlu0 %41
    %43 = vset.pattern.permute.xlu0 0
    %44 = vperm.xlu0 %43, %v31
    %v45 = vpop.permute.xlu0 %44
    %vm46 = vcmp.eq.s32.totalorder %v33, %v36
    %vm47 = vcmp.eq.s32.totalorder %v33, %v39
    %vm48 = vcmp.eq.s32.totalorder %v33, %v42
    %vm49 = vcmp.eq.s32.totalorder %v33, %v45
    %v50 = vadd.s32 %v28, 64
    %v51 = vadd.s32 %v29, 64
    %v52 = vadd.s32 %v30, 64
    %v53 = vadd.s32 %v31, 64
    %54 = vset.pattern.permute.xlu0 1
    %55 = vperm.xlu0 %54, %v50
    %v56 = vpop.permute.xlu0 %55
    %57 = vset.pattern.permute.xlu0 1
    %58 = vperm.xlu0 %57, %v51
    %v59 = vpop.permute.xlu0 %58
    %60 = vset.pattern.permute.xlu0 1
    %61 = vperm.xlu0 %60, %v52
    %v62 = vpop.permute.xlu0 %61
    %63 = vset.pattern.permute.xlu0 1
    %64 = vperm.xlu0 %63, %v53
    %v65 = vpop.permute.xlu0 %64
    %vm66 = vcmp.eq.s32.totalorder %v33, %v56
    %vm67 = vcmp.eq.s32.totalorder %v33, %v59
    %vm68 = vcmp.eq.s32.totalorder %v33, %v62
    %vm69 = vcmp.eq.s32.totalorder %v33, %v65
    %vm70 = vmor %vm46, %vm66
    %vm71 = vmor %vm47, %vm67
    %vm72 = vmor %vm48, %vm68
    %vm73 = vmor %vm49, %vm69
    %v74 = vsel %vm70, 1, 0
    %v75 = vsel %vm71, 1, 0
    %v76 = vsel %vm72, 1, 0
    %v77 = vsel %vm73, 1, 0
    %v78 = vcvt.s32.f32 %v74
    %v79 = vcvt.s32.f32 %v75
    %v80 = vcvt.s32.f32 %v76
    %v81 = vcvt.s32.f32 %v77
    %v82 = vpack.c.bf16 %v79, %v78
    %v83 = vpack.c.bf16 %v81, %v80
    %v84 = vld [vmem:[%s1] sm:$0xf]
    %v85 = vld [vmem:[%s1 + $0x4] sm:$0xf]
    %v86 = vld [vmem:[%s1 + $0x8] sm:$0xf]
    %v87 = vld [vmem:[%s1 + $0xc] sm:$0xf]
    %v88 = vld [vmem:[%s1 + $0x10] sm:$0xf]
    %v89 = vld [vmem:[%s1 + $0x14] sm:$0xf]
    %v90 = vld [vmem:[%s1 + $0x18] sm:$0xf]
    %v91 = vld [vmem:[%s1 + $0x1c] sm:$0xf]
    %v92 = vld [vmem:[%s1 + $0x20] sm:$0xf]
    %v93 = vld [vmem:[%s1 + $0x24] sm:$0xf]
    %v94 = vld [vmem:[%s1 + $0x28] sm:$0xf]
    %v95 = vld [vmem:[%s1 + $0x2c] sm:$0xf]
    %v96 = vld [vmem:[%s1 + $0x30] sm:$0xf]
    %v97 = vld [vmem:[%s1 + $0x34] sm:$0xf]
    %v98 = vld [vmem:[%s1 + $0x38] sm:$0xf]
    %v99 = vld [vmem:[%s1 + $0x3c] sm:$0xf]
    %v100 = vld [vmem:[%s5] sm:$0x1]
    %v101 = vlaneseq
    %v102 = vshrl.u32 %v101, 7
    %v103 = vsub.s32 0, %v102
    %v104 = vrot.slane %v100, %v103
    %v121 = vunpack.c.l.b16 %v84
    %v122 = vunpack.c.l.b16 %v85
    %v123 = vunpack.c.l.b16 %v86
    %v124 = vunpack.c.l.b16 %v87
    %v125 = vunpack.c.l.b16 %v88
    %v126 = vunpack.c.l.b16 %v89
    %v127 = vunpack.c.l.b16 %v90
    %v128 = vunpack.c.l.b16 %v91
    %v129 = vunpack.c.l.b16 %v92
    %v130 = vunpack.c.l.b16 %v93
    %v131 = vunpack.c.l.b16 %v94
    %v132 = vunpack.c.l.b16 %v95
    %v133 = vunpack.c.l.b16 %v96
    %v134 = vunpack.c.l.b16 %v97
    %v135 = vunpack.c.l.b16 %v98
    %v136 = vunpack.c.l.b16 %v99
    %v137 = vpack.c.b16 %v122, %v121
    %v138 = vpack.c.b16 %v124, %v123
    %v139 = vpack.c.b16 %v126, %v125
    %v140 = vpack.c.b16 %v128, %v127
    %v141 = vpack.c.b16 %v130, %v129
    %v142 = vpack.c.b16 %v132, %v131
    %v143 = vpack.c.b16 %v134, %v133
    %v144 = vpack.c.b16 %v136, %v135
    %153 = vmatprep.subr.bf16.mxu0 0
    %154 = vmatpush1.bf16.msra.mxu0 %v144
    %155 = vmatprep.subr.bf16.mxu0 0
    %156 = vmatpush1.bf16.msra.mxu0 %v143
    %157 = vmatprep.subr.bf16.mxu0 0
    %158 = vmatpush1.bf16.msra.mxu0 %v142
    %159 = vmatprep.subr.bf16.mxu0 0
    %160 = vmatpush1.bf16.msra.mxu0 %v141
    %161 = vmatprep.subr.bf16.mxu0 0
    %162 = vmatpush1.bf16.msra.mxu0 %v140
    %163 = vmatprep.subr.bf16.mxu0 0
    %164 = vmatpush1.bf16.msra.mxu0 %v139
    %165 = vmatprep.subr.bf16.mxu0 0
    %166 = vmatpush1.bf16.msra.mxu0 %v138
    %167 = vmatprep.subr.bf16.mxu0 0
    %168 = vmatpush1.bf16.msra.mxu0 %v137
    %169 = vmatprep.subr.bf16.mxu0 0
    %170 = vmatpush2.bf16.msra.mxu0 0
    %171 = vmatprep.subr.bf16.mxu0 0
    %172 = vmatpush2.bf16.msra.mxu0 0
    %173 = vmatprep.subr.bf16.mxu0 0
    %174 = vmatpush2.bf16.msra.mxu0 0
    %175 = vmatprep.subr.bf16.mxu0 0
    %176 = vmatpush2.bf16.msra.mxu0 0
    %177 = vmatprep.subr.bf16.mxu0 0
    %178 = vmatpush2.bf16.msra.mxu0 0
    %179 = vmatprep.subr.bf16.mxu0 0
    %180 = vmatpush2.bf16.msra.mxu0 0
    %181 = vmatprep.subr.bf16.mxu0 0
    %182 = vmatpush2.bf16.msra.mxu0 0
    %183 = vmatprep.subr.bf16.mxu0 0
    %184 = vmatpush2.bf16.msra.mxu0 0
    %185 = vmatprep.mubr.bf16.mxu0 0
    %186 = vmatmul.mubr.bf16.gmra.mxu0 %v82
    %v187 = vpop.f32.mrf.mxu0
    %v188 = vadd.f32 %v104, %v187
    %v189 = vpop.f32.mrf.mxu0
    %v190 = vpop.f32.mrf.mxu0
    %v191 = vadd.f32 %v104, %v190
    %v192 = vpop.f32.mrf.mxu0
    %193 = vmatprep.mubr.bf16.mxu0 0
    %194 = vmatmul.mubr.bf16.gmra.mxu0 %v83
    %v195 = vpop.f32.mrf.mxu0
    %v196 = vadd.f32 %v104, %v195
    %v197 = vpop.f32.mrf.mxu0
    %v198 = vpop.f32.mrf.mxu0
    %v199 = vadd.f32 %v104, %v198
    %v200 = vpop.f32.mrf.mxu0
    %201 = vdwg.mxu0
    %v202 = vmax.f32 %v188, 0.0
    %v203 = vmax.f32 %v191, 0.0
    %v204 = vmax.f32 %v196, 0.0
    %v205 = vmax.f32 %v199, 0.0
    %v206 = vld [vmem:[%s5 + $0x1] sm:$0x1]
    %v207 = vpack.c.bf16 %v203, %v202
    %v208 = vpack.c.bf16 %v205, %v204
    %v209 = vld [vmem:[%s2] sm:$0xf]
    %v210 = vld [vmem:[%s2 + $0x4] sm:$0xf]
    %v211 = vld [vmem:[%s2 + $0x8] sm:$0xf]
    %v212 = vld [vmem:[%s2 + $0xc] sm:$0xf]
    %v217 = vunpack.c.l.b16 %v209
    %v218 = vunpack.c.l.b16 %v210
    %v219 = vunpack.c.l.b16 %v211
    %v220 = vunpack.c.l.b16 %v212
    %v221 = vpack.c.b16 %v218, %v217
    %v222 = vpack.c.b16 %v220, %v219
    %vm225 = vcmask 261120
    %v227 = vsel %vm225, %v207, 0
    %v230 = vsel %vm225, %v208, 0
    %232 = vmatprep.subr.bf16.mxu0 0
    %233 = vmatpush1.bf16.msra.mxu0 0
    %234 = vmatprep.subr.bf16.mxu0 0
    %235 = vmatpush1.bf16.msra.mxu0 0
    %236 = vmatprep.subr.bf16.mxu0 0
    %237 = vmatpush1.bf16.msra.mxu0 0
    %238 = vmatprep.subr.bf16.mxu0 0
    %239 = vmatpush1.bf16.msra.mxu0 0
    %240 = vmatprep.subr.bf16.mxu0 0
    %241 = vmatpush1.bf16.msra.mxu0 0
    %242 = vmatprep.subr.bf16.mxu0 0
    %243 = vmatpush1.bf16.msra.mxu0 0
    %244 = vmatprep.subr.bf16.mxu0 0
    %245 = vmatpush1.bf16.msra.mxu0 %v222
    %246 = vmatprep.subr.bf16.mxu0 0
    %247 = vmatpush1.bf16.msra.mxu0 %v221
    %248 = vmatprep.subr.bf16.mxu0 0
    %249 = vmatpush2.bf16.msra.mxu0 0
    %250 = vmatprep.subr.bf16.mxu0 0
    %251 = vmatpush2.bf16.msra.mxu0 0
    %252 = vmatprep.subr.bf16.mxu0 0
    %253 = vmatpush2.bf16.msra.mxu0 0
    %254 = vmatprep.subr.bf16.mxu0 0
    %255 = vmatpush2.bf16.msra.mxu0 0
    %256 = vmatprep.subr.bf16.mxu0 0
    %257 = vmatpush2.bf16.msra.mxu0 0
    %258 = vmatprep.subr.bf16.mxu0 0
    %259 = vmatpush2.bf16.msra.mxu0 0
    %260 = vmatprep.subr.bf16.mxu0 0
    %261 = vmatpush2.bf16.msra.mxu0 0
    %262 = vmatprep.subr.bf16.mxu0 0
    %263 = vmatpush2.bf16.msra.mxu0 0
    %264 = vmatprep.mubr.bf16.mxu0 0
    %265 = vmatmul.mubr.bf16.gmra.mxu0 %v227
    %v266 = vpop.f32.mrf.mxu0
    %v267 = vadd.f32 0.0, %v266
    %v268 = vpop.f32.mrf.mxu0
    %v269 = vpop.f32.mrf.mxu0
    %v270 = vadd.f32 0.0, %v269
    %v271 = vpop.f32.mrf.mxu0
    %272 = vmatprep.mubr.bf16.mxu0 0
    %273 = vmatmul.mubr.bf16.gmra.mxu0 %v230
    %v274 = vpop.f32.mrf.mxu0
    %v275 = vadd.f32 0.0, %v274
    %v276 = vpop.f32.mrf.mxu0
    %v277 = vpop.f32.mrf.mxu0
    %v278 = vadd.f32 0.0, %v277
    %v279 = vpop.f32.mrf.mxu0
    %280 = vdwg.mxu0
    %285 = vrot.lane.b32.xlu0 %v267, 112
    %v286 = vpop.permute.xlu0 %285
    %287 = vrot.lane.b32.xlu0 %v270, 112
    %v288 = vpop.permute.xlu0 %287
    %289 = vrot.lane.b32.xlu0 %v275, 112
    %v290 = vpop.permute.xlu0 %289
    %291 = vrot.lane.b32.xlu0 %v278, 112
    %v292 = vpop.permute.xlu0 %291
    %v297 = vrot.slane %v286, 1
    %v298 = vrot.slane %v288, 1
    %v299 = vrot.slane %v290, 1
    %v300 = vrot.slane %v292, 1
    %v301 = vlaneseq
    %v302 = vshrl.u32 %v301, 7
    %vm303 = vcmp.lt.s32.totalorder %v302, 7
    %v304 = vsel %vm303, %v299, %v300
    %v305 = vsel %vm303, %v298, %v299
    %v306 = vsel %vm303, %v297, %v298
    %v307 = vsel %vm303, %v300, %v297
    %v308 = vadd.f32 %v267, %v306
    %v309 = vadd.f32 %v270, %v305
    %v310 = vadd.f32 %v275, %v304
    %v311 = vadd.f32 %v278, %v307
    %v312 = vlaneseq
    %v313 = vshrl.u32 %v312, 7
    %v314 = vsub.s32 0, %v313
    %v315 = vrot.slane %v206, %v314
    %v316 = vadd.f32 %v308, %v315
    %v317 = vadd.f32 %v309, %v315
    %v318 = vadd.f32 %v310, %v315
    %v319 = vadd.f32 %v311, %v315
    %v320 = vmax.f32 %v316, 0.0
    %v321 = vmax.f32 %v317, 0.0
    %v322 = vmax.f32 %v318, 0.0
    %v323 = vmax.f32 %v319, 0.0
    %v324 = vld [vmem:[%s5 + $0x2] sm:$0x1]
    %v325 = vpack.c.bf16 %v321, %v320
    %v326 = vpack.c.bf16 %v323, %v322
    %v327 = vld [vmem:[%s3] sm:$0xf]
    %v328 = vld [vmem:[%s3 + $0x4] sm:$0xf]
    %v331 = vunpack.c.l.b16 %v327
    %v332 = vunpack.c.l.b16 %v328
    %v333 = vpack.c.b16 %v332, %v331
    %vm335 = vcmask 130048
    %v337 = vsel %vm335, %v325, 0
    %v340 = vsel %vm335, %v326, 0
    %342 = vmatprep.subr.bf16.mxu0 0
    %343 = vmatpush1.bf16.msra.mxu0 0
    %344 = vmatprep.subr.bf16.mxu0 0
    %345 = vmatpush1.bf16.msra.mxu0 0
    %346 = vmatprep.subr.bf16.mxu0 0
    %347 = vmatpush1.bf16.msra.mxu0 0
    %348 = vmatprep.subr.bf16.mxu0 0
    %349 = vmatpush1.bf16.msra.mxu0 0
    %350 = vmatprep.subr.bf16.mxu0 0
    %351 = vmatpush1.bf16.msra.mxu0 0
    %352 = vmatprep.subr.bf16.mxu0 0
    %353 = vmatpush1.bf16.msra.mxu0 0
    %354 = vmatprep.subr.bf16.mxu0 0
    %355 = vmatpush1.bf16.msra.mxu0 0
    %356 = vmatprep.subr.bf16.mxu0 0
    %357 = vmatpush1.bf16.msra.mxu0 %v333
    %358 = vmatprep.subr.bf16.mxu0 0
    %359 = vmatpush2.bf16.msra.mxu0 0
    %360 = vmatprep.subr.bf16.mxu0 0
    %361 = vmatpush2.bf16.msra.mxu0 0
    %362 = vmatprep.subr.bf16.mxu0 0
    %363 = vmatpush2.bf16.msra.mxu0 0
    %364 = vmatprep.subr.bf16.mxu0 0
    %365 = vmatpush2.bf16.msra.mxu0 0
    %366 = vmatprep.subr.bf16.mxu0 0
    %367 = vmatpush2.bf16.msra.mxu0 0
    %368 = vmatprep.subr.bf16.mxu0 0
    %369 = vmatpush2.bf16.msra.mxu0 0
    %370 = vmatprep.subr.bf16.mxu0 0
    %371 = vmatpush2.bf16.msra.mxu0 0
    %372 = vmatprep.subr.bf16.mxu0 0
    %373 = vmatpush2.bf16.msra.mxu0 0
    %374 = vmatprep.mubr.bf16.mxu0 0
    %375 = vmatmul.mubr.bf16.gmra.mxu0 %v337
    %v376 = vpop.f32.mrf.mxu0
    %v377 = vadd.f32 0.0, %v376
    %v378 = vpop.f32.mrf.mxu0
    %v379 = vpop.f32.mrf.mxu0
    %v380 = vadd.f32 0.0, %v379
    %v381 = vpop.f32.mrf.mxu0
    %382 = vmatprep.mubr.bf16.mxu0 0
    %383 = vmatmul.mubr.bf16.gmra.mxu0 %v340
    %v384 = vpop.f32.mrf.mxu0
    %v385 = vadd.f32 0.0, %v384
    %v386 = vpop.f32.mrf.mxu0
    %v387 = vpop.f32.mrf.mxu0
    %v388 = vadd.f32 0.0, %v387
    %v389 = vpop.f32.mrf.mxu0
    %390 = vdwg.mxu0
    %395 = vrot.lane.b32.xlu0 %v377, 112
    %v396 = vpop.permute.xlu0 %395
    %397 = vrot.lane.b32.xlu0 %v380, 112
    %v398 = vpop.permute.xlu0 %397
    %399 = vrot.lane.b32.xlu0 %v385, 112
    %v400 = vpop.permute.xlu0 %399
    %401 = vrot.lane.b32.xlu0 %v388, 112
    %v402 = vpop.permute.xlu0 %401
    %v407 = vrot.slane %v396, 1
    %v408 = vrot.slane %v398, 1
    %v409 = vrot.slane %v400, 1
    %v410 = vrot.slane %v402, 1
    %v411 = vsel %vm303, %v409, %v410
    %v412 = vsel %vm303, %v408, %v409
    %v413 = vsel %vm303, %v407, %v408
    %v414 = vsel %vm303, %v410, %v407
    %v415 = vadd.f32 %v377, %v413
    %v416 = vadd.f32 %v380, %v412
    %v417 = vadd.f32 %v385, %v411
    %v418 = vadd.f32 %v388, %v414
    %v419 = vlaneseq
    %v420 = vshrl.u32 %v419, 7
    %v421 = vsub.s32 0, %v420
    %v422 = vrot.slane %v324, %v421
    %v423 = vadd.f32 %v415, %v422
    %v424 = vadd.f32 %v416, %v422
    %v425 = vadd.f32 %v417, %v422
    %v426 = vadd.f32 %v418, %v422
    %v427 = vmax.f32 %v423, 0.0
    %v428 = vmax.f32 %v424, 0.0
    %v429 = vmax.f32 %v425, 0.0
    %v430 = vmax.f32 %v426, 0.0
    %v431 = vld [vmem:[%s6] sm:$0x1]
    %v432 = vpack.c.bf16 %v428, %v427
    %v433 = vpack.c.bf16 %v430, %v429
    %v435 = vsel %vm225, %v431, 0
    %437 = vmatprep.subr.bf16.mxu0 0
    %438 = vmatpush1.bf16.msra.mxu0 0
    %439 = vmatprep.subr.bf16.mxu0 0
    %440 = vmatpush1.bf16.msra.mxu0 0
    %441 = vmatprep.subr.bf16.mxu0 0
    %442 = vmatpush1.bf16.msra.mxu0 0
    %443 = vmatprep.subr.bf16.mxu0 0
    %444 = vmatpush1.bf16.msra.mxu0 0
    %445 = vmatprep.subr.bf16.mxu0 0
    %446 = vmatpush1.bf16.msra.mxu0 0
    %447 = vmatprep.subr.bf16.mxu0 0
    %448 = vmatpush1.bf16.msra.mxu0 0
    %449 = vmatprep.subr.bf16.mxu0 0
    %450 = vmatpush1.bf16.msra.mxu0 %v433
    %451 = vmatprep.subr.bf16.mxu0 0
    %452 = vmatpush1.bf16.msra.mxu0 %v432
    %453 = vmatprep.subr.bf16.mxu0 0
    %454 = vmatpush2.bf16.msra.mxu0 0
    %455 = vmatprep.subr.bf16.mxu0 0
    %456 = vmatpush2.bf16.msra.mxu0 0
    %457 = vmatprep.subr.bf16.mxu0 0
    %458 = vmatpush2.bf16.msra.mxu0 0
    %459 = vmatprep.subr.bf16.mxu0 0
    %460 = vmatpush2.bf16.msra.mxu0 0
    %461 = vmatprep.subr.bf16.mxu0 0
    %462 = vmatpush2.bf16.msra.mxu0 0
    %463 = vmatprep.subr.bf16.mxu0 0
    %464 = vmatpush2.bf16.msra.mxu0 0
    %465 = vmatprep.subr.bf16.mxu0 0
    %466 = vmatpush2.bf16.msra.mxu0 0
    %467 = vmatprep.subr.bf16.mxu0 0
    %468 = vmatpush2.bf16.msra.mxu0 0
    %469 = vmatprep.mubr.bf16.mxu0 0
    %470 = vmatmul.mubr.bf16.gmra.mxu0 %v435
    %v471 = vpop.f32.mrf.mxu0
    %v472 = vadd.f32 0.0, %v471
    %v473 = vpop.f32.mrf.mxu0
    %v474 = vpop.f32.mrf.mxu0
    %v475 = vpop.f32.mrf.mxu0
    %476 = vdwg.mxu0
    %v477 = vld [vmem:[%s4] sm:$0xff]
    %v478 = vld [vmem:[%s4 + $0x8] sm:$0xff]
    %v479 = vld [vmem:[%s5 + $0x3] sm:$0x1]
    %v480 = vlaneseq
    %v481 = vshrl.u32 %v480, 7
    %v482 = vsub.s32 0, %v481
    %v483 = vrot.slane %v479, %v482
    %v485 = vsel %vm335, %v472, 0
    %487 = vmatprep.subr.mxu0 0.0
    %488 = vmatpush1.msra.mxu0 0.0
    %489 = vmatprep.subr.mxu0 0.0
    %490 = vmatpush1.msra.mxu0 0.0
    %491 = vmatprep.subr.mxu0 0.0
    %492 = vmatpush1.msra.mxu0 0.0
    %493 = vmatprep.subr.mxu0 0.0
    %494 = vmatpush1.msra.mxu0 0.0
    %495 = vmatprep.subr.mxu0 0.0
    %496 = vmatpush1.msra.mxu0 0.0
    %497 = vmatprep.subr.mxu0 0.0
    %498 = vmatpush1.msra.mxu0 0.0
    %499 = vmatprep.subr.mxu0 0.0
    %500 = vmatpush1.msra.mxu0 0.0
    %501 = vmatprep.subr.mxu0 0.0
    %502 = vmatpush1.msra.mxu0 0.0
    %503 = vmatprep.subr.mxu0 0.0
    %504 = vmatpush1.msra.mxu0 0.0
    %505 = vmatprep.subr.mxu0 0.0
    %506 = vmatpush1.msra.mxu0 0.0
    %507 = vmatprep.subr.mxu0 0.0
    %508 = vmatpush1.msra.mxu0 0.0
    %509 = vmatprep.subr.mxu0 0.0
    %510 = vmatpush1.msra.mxu0 0.0
    %511 = vmatprep.subr.mxu0 0.0
    %512 = vmatpush1.msra.mxu0 0.0
    %513 = vmatprep.subr.mxu0 0.0
    %514 = vmatpush1.msra.mxu0 0.0
    %515 = vmatprep.subr.mxu0 0.0
    %516 = vmatpush1.msra.mxu0 %v478
    %517 = vmatprep.subr.mxu0 0.0
    %518 = vmatpush1.msra.mxu0 %v477
    %519 = vmatprep.subr.mxu0 0.0
    %520 = vmatpush2.msra.mxu0 0.0
    %521 = vmatprep.subr.mxu0 0.0
    %522 = vmatpush2.msra.mxu0 0.0
    %523 = vmatprep.subr.mxu0 0.0
    %524 = vmatpush2.msra.mxu0 0.0
    %525 = vmatprep.subr.mxu0 0.0
    %526 = vmatpush2.msra.mxu0 0.0
    %527 = vmatprep.subr.mxu0 0.0
    %528 = vmatpush2.msra.mxu0 0.0
    %529 = vmatprep.subr.mxu0 0.0
    %530 = vmatpush2.msra.mxu0 0.0
    %531 = vmatprep.subr.mxu0 0.0
    %532 = vmatpush2.msra.mxu0 0.0
    %533 = vmatprep.subr.mxu0 0.0
    %534 = vmatpush2.msra.mxu0 0.0
    %535 = vmatprep.subr.mxu0 0.0
    %536 = vmatpush2.msra.mxu0 0.0
    %537 = vmatprep.subr.mxu0 0.0
    %538 = vmatpush2.msra.mxu0 0.0
    %539 = vmatprep.subr.mxu0 0.0
    %540 = vmatpush2.msra.mxu0 0.0
    %541 = vmatprep.subr.mxu0 0.0
    %542 = vmatpush2.msra.mxu0 0.0
    %543 = vmatprep.subr.mxu0 0.0
    %544 = vmatpush2.msra.mxu0 0.0
    %545 = vmatprep.subr.mxu0 0.0
    %546 = vmatpush2.msra.mxu0 0.0
    %547 = vmatprep.subr.mxu0 0.0
    %548 = vmatpush2.msra.mxu0 0.0
    %549 = vmatprep.subr.mxu0 0.0
    %550 = vmatpush2.msra.mxu0 0.0
    %551 = vmatprep.mubr.f32.mxu0 0.0
    %552 = vmatmul.mubr.f32.gmra.mxu0 %v485
    %v553 = vpop.f32.mrf.mxu0
    %v554 = vadd.f32 %v483, %v553
    %v555 = vpop.f32.mrf.mxu0
    %556 = vdwg.mxu0
    %v557 = vmax.f32 %v554, 0.0
    %558 = vst [vmem:[#allocation2] sm:$0x3] %v557
    // Predicated region
    $region30: #{tpu_custom_call.1} parent=1 // pred_check
      _
    $region31: #{tpu_custom_call.1} parent=1 // pred_check_branch
      %560 = sbr.rel (0) target = $region33
    $region32: #{tpu_custom_call.1} parent=1 // pred_region
      %s562 = ssub.s32 32, 32
      %563 = vsyncadd [#allocation3], %s562
      %s565 = sshll.u32 [#allocation2], 4
      %s566 = int_to_ptr.vmem [resolvable:$true] %s565
      %568 = dma.vmem_to_hbm [thread:$0]  %s566, 32, %s7, [#allocation3]
    $region33: #{tpu_custom_call.1} parent=1 // pred_fallthru
      _
    // Predicated region
    $region34: #{tpu_custom_call.1} parent=1 // pred_check
      _
    $region35: #{tpu_custom_call.1} parent=1 // pred_check_branch
      %570 = sbr.rel (0) target = $region37
    $region36: #{tpu_custom_call.1} parent=1 // pred_region
      %571 = dma.done [#allocation3], 32
    $region37: #{tpu_custom_call.1} parent=1 // pred_fallthru
      _
    %572 = vsyncpa [#allocation3], 1

</llo_original>
